<compile_context>
chip_gen: v7x
topology: tpu7x:2x2x1
jax: 0.10.0
libtpu: 0.0.40
codegen_flags: <defaults>
</compile_context>

<pallas_src>
import functools
import itertools
import math

import jax
import jax.numpy as jnp
from jax.experimental import pallas as pl
from jax.experimental.pallas import tpu as pltpu

_VMEM_LIMIT = 48 * 1024 * 1024  # comfortable on v5e/v6e (128 MiB) and v7x (64 MiB)


# ----------------------------------------------------------------------------
# Pallas kernels
# ----------------------------------------------------------------------------

def _mm_affine_kernel(a_ref, w_ref, scale_ref, shift_ref,
                      y_ref, sum_ref, sq_ref, *, relu):
    """(tm, K) @ (K, N) on the MXU with fused per-column affine / ReLU epilogue.

    Also accumulates per-column sum / sum-of-squares of the *pre-affine*
    product across the row-tile grid axis (used for train-mode BatchNorm
    statistics, so no separate stats pass over HBM is needed)."""
    @pl.when(pl.program_id(0) == 0)
    def _():
        sum_ref[...] = jnp.zeros_like(sum_ref)
        sq_ref[...] = jnp.zeros_like(sq_ref)
    acc = jnp.dot(a_ref[...].astype(jnp.bfloat16), w_ref[...],
                  preferred_element_type=jnp.float32)
    sum_ref[...] += jnp.sum(acc, axis=0, keepdims=True)
    sq_ref[...] += jnp.sum(acc * acc, axis=0, keepdims=True)
    y = acc * scale_ref[...] + shift_ref[...]
    if relu:
        y = jnp.maximum(y, 0.0)
    y_ref[...] = y


def _direct_conv_kernel(x_ref, w_ref, scale_ref, shift_ref,
                        y_ref, sum_ref, sq_ref,
                        *, kh, kw, cin, cout, ho, wo, relu):
    """Direct stride-1 'same' conv: taps folded into an unrolled K loop over
    shifted windows of the pre-padded input block (no HBM im2col)."""
    @pl.when(pl.program_id(0) == 0)
    def _():
        sum_ref[...] = jnp.zeros_like(sum_ref)
        sq_ref[...] = jnp.zeros_like(sq_ref)
    acc = jnp.zeros((ho * wo, cout), jnp.float32)
    for di in range(kh):
        for dj in range(kw):
            xs = x_ref[0, di:di + ho, dj:dj + wo, :]
            xs = xs.reshape(ho * wo, cin).astype(jnp.bfloat16)
            t = di * kw + dj
            acc = acc + jnp.dot(xs, w_ref[t * cin:(t + 1) * cin, :],
                                preferred_element_type=jnp.float32)
    sum_ref[...] += jnp.sum(acc, axis=0, keepdims=True)
    sq_ref[...] += jnp.sum(acc * acc, axis=0, keepdims=True)
    y = acc * scale_ref[...] + shift_ref[...]
    if relu:
        y = jnp.maximum(y, 0.0)
    y_ref[...] = y.reshape(1, ho, wo, cout)


def _affine_kernel(x_ref, s_ref, b_ref, o_ref, *, relu):
    y = x_ref[...] * s_ref[...] + b_ref[...]
    if relu:
        y = jnp.maximum(y, 0.0)
    o_ref[...] = y


def _affine_res_kernel(x_ref, s_ref, b_ref, r_ref, o_ref, *, relu):
    y = x_ref[...] * s_ref[...] + b_ref[...] + r_ref[...]
    if relu:
        y = jnp.maximum(y, 0.0)
    o_ref[...] = y


# ----------------------------------------------------------------------------
# Pallas wrappers
# ----------------------------------------------------------------------------

def _row_tiling(m, cap=8192):
    """Pick (padded_rows, row_tile) for a 2-D slab; single block when small."""
    if m <= cap:
        return m, m
    for t in (cap, 4096, 2048, 1024, 512, 256):
        if m % t == 0:
            return m, t
    mp = ((m + 255) // 256) * 256
    return mp, 256


def pallas_mm_affine(a, w, scale, shift, relu):
    """y = [relu]((a @ w) * scale + shift), plus per-column sum / sumsq of a@w."""
    m, k = a.shape
    k2, nc = w.shape
    assert k == k2
    a = a.astype(jnp.float32)
    m_orig = m
    mp, tm = _row_tiling(m)
    if mp != m:
        a = jnp.pad(a, ((0, mp - m), (0, 0)))  # zero rows: stats unaffected
        m = mp
    scale = scale.astype(jnp.float32).reshape(1, nc)
    shift = shift.astype(jnp.float32).reshape(1, nc)
    kern = functools.partial(_mm_affine_kernel, relu=relu)
    y, s, q = pl.pallas_call(
        kern,
        out_shape=(jax.ShapeDtypeStruct((m, nc), jnp.float32),
                   jax.ShapeDtypeStruct((1, nc), jnp.float32),
                   jax.ShapeDtypeStruct((1, nc), jnp.float32)),
        grid_spec=pltpu.PrefetchScalarGridSpec(
            num_scalar_prefetch=0,
            grid=(m // tm,),
            in_specs=[pl.BlockSpec((tm, k), lambda i: (i, 0)),
                      pl.BlockSpec((k, nc), lambda i: (0, 0)),
                      pl.BlockSpec((1, nc), lambda i: (0, 0)),
                      pl.BlockSpec((1, nc), lambda i: (0, 0))],
            out_specs=[pl.BlockSpec((tm, nc), lambda i: (i, 0)),
                       pl.BlockSpec((1, nc), lambda i: (0, 0)),
                       pl.BlockSpec((1, nc), lambda i: (0, 0))]),
        compiler_params=pltpu.CompilerParams(
            dimension_semantics=("arbitrary",),
            vmem_limit_bytes=_VMEM_LIMIT),
    )(a, w, scale, shift)
    if m != m_orig:
        y = y[:m_orig]
    return y, s[0], q[0]


def pallas_conv_direct(x, wmat, k, cout, scale, shift, relu):
    """Stride-1 'same' NHWC conv without materializing im2col patches."""
    n, h, w_, cin = x.shape
    pad = (k - 1) // 2
    xp = x.astype(jnp.float32)
    if pad:
        xp = jnp.pad(xp, ((0, 0), (pad, pad), (pad, pad), (0, 0)))
    hp, wp = h + 2 * pad, w_ + 2 * pad
    scale = scale.astype(jnp.float32).reshape(1, cout)
    shift = shift.astype(jnp.float32).reshape(1, cout)
    kern = functools.partial(_direct_conv_kernel, kh=k, kw=k, cin=cin,
                             cout=cout, ho=h, wo=w_, relu=relu)
    y, s, q = pl.pallas_call(
        kern,
        out_shape=(jax.ShapeDtypeStruct((n, h, w_, cout), jnp.float32),
                   jax.ShapeDtypeStruct((1, cout), jnp.float32),
                   jax.ShapeDtypeStruct((1, cout), jnp.float32)),
        grid_spec=pltpu.PrefetchScalarGridSpec(
            num_scalar_prefetch=0,
            grid=(n,),
            in_specs=[pl.BlockSpec((1, hp, wp, cin), lambda b: (b, 0, 0, 0)),
                      pl.BlockSpec((k * k * cin, cout), lambda b: (0, 0)),
                      pl.BlockSpec((1, cout), lambda b: (0, 0)),
                      pl.BlockSpec((1, cout), lambda b: (0, 0))],
            out_specs=[pl.BlockSpec((1, h, w_, cout), lambda b: (b, 0, 0, 0)),
                       pl.BlockSpec((1, cout), lambda b: (0, 0)),
                       pl.BlockSpec((1, cout), lambda b: (0, 0))]),
        compiler_params=pltpu.CompilerParams(
            dimension_semantics=("arbitrary",),
            vmem_limit_bytes=_VMEM_LIMIT),
    )(xp, wmat, scale, shift)
    return y, s[0], q[0]


def pallas_affine(x2d, scale, shift, residual=None, relu=False):
    """y = [relu](x * scale + shift [+ residual]); scale/shift per channel."""
    m, c = x2d.shape
    m_orig = m
    mp, tm = _row_tiling(m, cap=16384)
    x = x2d.astype(jnp.float32)
    r = None if residual is None else residual.astype(jnp.float32)
    if mp != m:
        x = jnp.pad(x, ((0, mp - m), (0, 0)))
        if r is not None:
            r = jnp.pad(r, ((0, mp - m), (0, 0)))
        m = mp
    scale = scale.astype(jnp.float32).reshape(1, c)
    shift = shift.astype(jnp.float32).reshape(1, c)
    row_spec = pl.BlockSpec((tm, c), lambda i: (i, 0))
    vec_spec = pl.BlockSpec((1, c), lambda i: (0, 0))
    if r is None:
        kern = functools.partial(_affine_kernel, relu=relu)
        ins, in_specs = (x, scale, shift), [row_spec, vec_spec, vec_spec]
    else:
        kern = functools.partial(_affine_res_kernel, relu=relu)
        ins, in_specs = (x, scale, shift, r), [row_spec, vec_spec, vec_spec, row_spec]
    out = pl.pallas_call(
        kern,
        out_shape=jax.ShapeDtypeStruct((m, c), jnp.float32),
        grid_spec=pltpu.PrefetchScalarGridSpec(
            num_scalar_prefetch=0,
            grid=(m // tm,),
            in_specs=in_specs,
            out_specs=pl.BlockSpec((tm, c), lambda i: (i, 0))),
        compiler_params=pltpu.CompilerParams(
            dimension_semantics=("parallel",)),
    )(*ins)
    if m != m_orig:
        out = out[:m_orig]
    return out


# ----------------------------------------------------------------------------
# Layer helpers
# ----------------------------------------------------------------------------

def _im2col(x, kh, kw, stride, pad, pad_mode="zeros"):
    """NHWC -> (N*Ho*Wo, kh*kw*C) patches; only used for the tiny strided
    encoder layers (a few KB), the big convs use the direct kernel."""
    n, h, w, c = x.shape
    if pad > 0:
        mode = "edge" if pad_mode == "edge" else "constant"
        xp = jnp.pad(x, ((0, 0), (pad, pad), (pad, pad), (0, 0)), mode=mode)
    else:
        xp = x
    hp, wp = h + 2 * pad, w + 2 * pad
    ho = (hp - kh) // stride + 1
    wo = (wp - kw) // stride + 1
    cols = []
    for i in range(kh):
        for j in range(kw):
            cols.append(xp[:, i:i + stride * ho:stride, j:j + stride * wo:stride, :])
    patches = jnp.concatenate(cols, axis=-1)
    return patches.reshape(n * ho * wo, kh * kw * c), (n, ho, wo)


def conv2d(x, wmat, k, cout, *, stride=1, pad=None, pad_mode="zeros",
           scale=None, shift=None, relu=False):
    """PyTorch Conv2d on NHWC input with fused affine/ReLU epilogue.

    Returns (y_nhwc, sum_c, sumsq_c) where the statistics are per-output-
    channel sums of the *pre-affine* conv output (for train-mode BN)."""
    n, h, w, cin = x.shape
    if pad is None:
        pad = (k - 1) // 2
    if scale is None:
        scale = jnp.ones((cout,), jnp.float32)
    if shift is None:
        shift = jnp.zeros((cout,), jnp.float32)
    ho = (h + 2 * pad - k) // stride + 1
    wo = (w + 2 * pad - k) // stride + 1
    if (stride == 1 and ho == h and wo == w and w % 8 == 0
            and pad_mode == "zeros"):
        return pallas_conv_direct(x, wmat, k, cout, scale, shift, relu)
    # Tiny / strided layers fall back to im2col + fused matmul (bytes are KBs).
    a, _ = _im2col(x, k, k, stride, pad, pad_mode)
    y2, s, q = pallas_mm_affine(a, wmat, scale, shift, relu)
    return y2.reshape(n, ho, wo, cout), s, q


def conv_transpose(x, wmat, k, cout, *, bias=None, relu=False):
    """ConvTranspose2d with kernel_size == stride via fused matmul + shuffle."""
    n, h, w, cin = x.shape
    ncol = cout * k * k
    scale = jnp.ones((ncol,), jnp.float32)
    if bias is None:
        shift = jnp.zeros((ncol,), jnp.float32)
    else:
        shift = jnp.repeat(bias.astype(jnp.float32), k * k)
    y2, s, q = pallas_mm_affine(x.reshape(n * h * w, cin), wmat, scale, shift, relu)
    # TODO(synk): the depth-to-space pixel shuffle below is a plain XLA
    # transpose; fusing it into the matmul epilogue (strided stores) would
    # save one additional HBM pass over the ConvT outputs.
    y = y2.reshape(n, h, w, cout, k, k).transpose(0, 1, 4, 2, 5, 3)
    y = y.reshape(n, h * k, w * k, cout)
    s_c = s.reshape(cout, k * k).sum(axis=1)
    q_c = q.reshape(cout, k * k).sum(axis=1)
    return y, s_c, q_c


def _bn_scale_shift(s, q, count, bn, eps=1e-5):
    mean = s / count
    var = jnp.maximum(q / count - mean * mean, 0.0)    # biased (train mode)
    inv = jax.lax.rsqrt(var + eps)
    scale = bn["gamma"] * inv
    shift = bn["beta"] - mean * scale
    return scale, shift


def apply_bn(y, s, q, bn, relu, residual=None):
    """Training-mode BatchNorm2d (batch statistics) + optional residual + ReLU."""
    n, h, w, c = y.shape
    m = n * h * w
    scale, shift = _bn_scale_shift(s, q, m, bn)
    r2 = None if residual is None else residual.reshape(m, c)
    out = pallas_affine(y.reshape(m, c), scale, shift, residual=r2, relu=relu)
    return out.reshape(n, h, w, c)


def maxpool_3x3_s2_p1(x):
    # TODO(synk): MaxPool2d(3,2,1) uses jax.lax.reduce_window (tiny tensor).
    return jax.lax.reduce_window(
        x, -jnp.inf, jax.lax.max,
        window_dimensions=(1, 3, 3, 1),
        window_strides=(1, 2, 2, 1),
        padding=((0, 0), (1, 1), (1, 1), (0, 0)))


def _match_spatial(x, ref):
    """Mirror torch F.pad(x, [dw//2, dw-dw//2, dh//2, dh-dh//2]) (neg = crop)."""
    dh = ref.shape[1] - x.shape[1]
    dw = ref.shape[2] - x.shape[2]
    if dh == 0 and dw == 0:
        return x

    def adj(a, axis, before, after):
        pads = [(0, 0)] * a.ndim
        pads[axis] = (max(before, 0), max(after, 0))
        a = jnp.pad(a, pads)
        lo = max(-before, 0)
        hi = a.shape[axis] - max(-after, 0)
        return jax.lax.slice_in_dim(a, lo, hi, axis=axis)

    x = adj(x, 2, dw // 2, dw - dw // 2)
    x = adj(x, 1, dh // 2, dh - dh // 2)
    return x


# ----------------------------------------------------------------------------
# Parameters (deterministic random init; weights stored as bf16 matrices)
# ----------------------------------------------------------------------------

_counter = itertools.count()
_PKEY = jax.random.PRNGKey(1234)


def _randn(shape, fan_in):
    k = jax.random.fold_in(_PKEY, next(_counter))
    return (jax.random.normal(k, shape, jnp.float32)
            * (1.0 / math.sqrt(max(fan_in, 1))))


def conv_wmat(cout, cin, k):
    """Conv2d weight (Cout,Cin,k,k) -> (k*k*Cin, Cout) bf16, taps-major rows."""
    w = _randn((cout, cin, k, k), cin * k * k)
    return jnp.transpose(w, (2, 3, 1, 0)).reshape(k * k * cin, cout).astype(jnp.bfloat16)


def convt_wmat(cin, cout, k):
    """ConvTranspose2d weight (Cin,Cout,k,k) -> (Cin, Cout*k*k) bf16."""
    w = _randn((cin, cout, k, k), cin * k * k)
    return w.reshape(cin, cout * k * k).astype(jnp.bfloat16)


def bias_v(c):
    return _randn((c,), c) * 0.1


def bn_p(c):
    return {"gamma": jnp.ones((c,), jnp.float32),
            "beta": jnp.zeros((c,), jnp.float32)}


def make_resblock_params(cin, cout, stride):
    p = {"stride": stride, "cout": cout,
         "w1": conv_wmat(cout, cin, 3), "bn1": bn_p(cout),
         "w2": conv_wmat(cout, cout, 3), "bn2": bn_p(cout)}
    if stride != 1 or cin != cout:
        p["wsc"] = conv_wmat(cout, cin, 1)
        p["bn_sc"] = bn_p(cout)
    return p


def make_layer(cin, cout, blocks, stride):
    layers = [make_resblock_params(cin, cout, stride)]
    for _ in range(1, blocks):
        layers.append(make_resblock_params(cout, cout, 1))
    return layers


def make_encoder_params(in_channels):
    return {"w1": conv_wmat(64, in_channels, 7), "bn1": bn_p(64),
            "layer1": make_layer(64, 64, 2, 1),
            "layer2": make_layer(64, 128, 2, 2),
            "layer3": make_layer(128, 256, 2, 2),
            "layer4": make_layer(256, 512, 2, 2)}


def make_upblock_params(cin, cout):
    # ConvT / Conv biases inside these blocks are cancelled by train-mode BN.
    return {"cout": cout, "tw": convt_wmat(cin, cout, 2), "bn1": bn_p(cout),
            "cw": conv_wmat(cout, cout, 3), "bn2": bn_p(cout)}


def make_decoder_params(out_channels):
    return {"out_channels": out_channels,
            "up4": make_upblock_params(512, 256),
            "up3": make_upblock_params(256 + 256, 128),
            "up2": make_upblock_params(128 + 128, 64),
            "up1": make_upblock_params(64 + 64, 64),
            "final_up_w": convt_wmat(64 + 64, 32, 2), "final_up_b": bias_v(32),
            "fc1_w": conv_wmat(16, 32, 3), "fc1_b": bias_v(16),
            "fc2_w": conv_wmat(out_channels, 16, 1), "fc2_b": bias_v(out_channels)}


def make_upsampling_params(out_channels, scale_factor):
    layers = []
    if scale_factor <= 1:
        return layers
    current, first = 1, True
    while current < scale_factor:
        if scale_factor // current >= 4:
            f = 4
        elif scale_factor // current >= 2:
            f = 2
        else:
            f = scale_factor // current
        cin = out_channels if first else 32
        layers.append({"type": "convT", "w": convt_wmat(cin, 32, f),
                       "b": bias_v(32), "k": f})
        layers.append({"type": "conv3", "w": conv_wmat(32, 32, 3), "b": bias_v(32)})
        first = False
        current *= f
    layers.append({"type": "conv1", "w": conv_wmat(out_channels, 32, 1),
                   "b": bias_v(out_channels), "cout": out_channels})
    return layers


def make_params(in_channels=1, out_channels=1, scale_factor=8):
    return {"encoder": make_encoder_params(in_channels),
            "decoder": make_decoder_params(out_channels),
            "upsampling": make_upsampling_params(out_channels, scale_factor)}


# ----------------------------------------------------------------------------
# Forward pass
# ----------------------------------------------------------------------------

def resnet_block_fwd(x, p):
    cout = p["cout"]
    y, s, q = conv2d(x, p["w1"], 3, cout, stride=p["stride"])
    h1 = apply_bn(y, s, q, p["bn1"], relu=True)
    if "wsc" in p:
        ys, ss, qs = conv2d(x, p["wsc"], 1, cout, stride=p["stride"])
        sc = apply_bn(ys, ss, qs, p["bn_sc"], relu=False)
    else:
        sc = x
    y, s, q = conv2d(h1, p["w2"], 3, cout, stride=1)
    return apply_bn(y, s, q, p["bn2"], relu=True, residual=sc)


def encoder_fwd(x, p):
    feats = []
    y, s, q = conv2d(x, p["w1"], 7, 64, stride=2, pad=3, pad_mode="edge")
    x = apply_bn(y, s, q, p["bn1"], relu=True)
    feats.append(x)
    x = maxpool_3x3_s2_p1(x)
    for lname in ("layer1", "layer2", "layer3", "layer4"):
        for bp in p[lname]:
            x = resnet_block_fwd(x, bp)
        feats.append(x)
    return x, feats


def upconv_block_fwd(x, p):
    cout = p["cout"]
    y, s, q = conv_transpose(x, p["tw"], 2, cout)          # bias cancelled by BN
    h = apply_bn(y, s, q, p["bn1"], relu=True)
    y, s, q = conv2d(h, p["cw"], 3, cout)
    return apply_bn(y, s, q, p["bn2"], relu=True)


def decoder_fwd(x, feats, p):
    for name, skip in (("up4", feats[3]), ("up3", feats[2]),
                       ("up2", feats[1]), ("up1", feats[0])):
        x = upconv_block_fwd(x, p[name])
        x = _match_spatial(x, skip)
        x = jnp.concatenate([x, skip], axis=-1)
    x, _, _ = conv_transpose(x, p["final_up_w"], 2, 32,
                             bias=p["final_up_b"], relu=False)
    x, _, _ = conv2d(x, p["fc1_w"], 3, 16, shift=p["fc1_b"], relu=True)
    x, _, _ = conv2d(x, p["fc2_w"], 1, p["out_channels"], shift=p["fc2_b"],
                     relu=False)
    return x


def upsampling_fwd(x, layers):
    for lyr in layers:
        if lyr["type"] == "convT":
            x, _, _ = conv_transpose(x, lyr["w"], lyr["k"], 32,
                                     bias=lyr["b"], relu=True)
        elif lyr["type"] == "conv3":
            x, _, _ = conv2d(x, lyr["w"], 3, 32, shift=lyr["b"], relu=True)
        else:  # final 1x1 conv, no ReLU
            x, _, _ = conv2d(x, lyr["w"], 1, lyr["cout"], shift=lyr["b"],
                             relu=False)
    return x


def unet_resnet_sr_forward(x_nchw, params, target_height=2048, target_width=200):
    x = jnp.transpose(x_nchw.astype(jnp.float32), (0, 2, 3, 1))   # NCHW -> NHWC
    encoded, feats = encoder_fwd(x, params["encoder"])
    decoded = decoder_fwd(encoded, feats, params["decoder"])
    out = upsampling_fwd(decoded, params["upsampling"])
    if out.shape[1] > target_height:
        out = out[:, :target_height]
    if out.shape[2] > target_width:
        out = out[:, :, :target_width]
    return jnp.transpose(out, (0, 3, 1, 2))                       # NHWC -> NCHW


# ----------------------------------------------------------------------------
# main
# ----------------------------------------------------------------------------

if __name__ == "__main__":
    in_channels, out_channels, scale_factor = 1, 1, 8
    target_height, target_width = 2048, 200          # module defaults

    params = make_params(in_channels, out_channels, scale_factor)

    key = jax.random.PRNGKey(0)
    # Small input (spatial=16); survives the /32 encoder downsample via the
    # same floor-division conv arithmetic as PyTorch.
    x = jax.random.normal(key, (2, in_channels, 16, 16), dtype=jnp.float32)

    out = unet_resnet_sr_forward(x, params, target_height, target_width)
    out = jax.block_until_ready(out)

    # 16x16 -> decoder 16x16 -> x8 upsampling = 128x128 (no target crop)
    assert out.shape == (2, out_channels, 128, 128), out.shape
    assert bool(jnp.all(jnp.isfinite(out)))
    print("KERNEL_OK")
</pallas_src>

<mosaic_0001>
module attributes {stable_mosaic.version = 11 : i64} {
  func.func @_mm_affine_kernel(%arg0: i32, %arg1: memref<128x49xf32, #tpu.memory_space<vmem>>, %arg2: memref<49x64xbf16, #tpu.memory_space<vmem>>, %arg3: memref<1x64xf32, #tpu.memory_space<vmem>>, %arg4: memref<1x64xf32, #tpu.memory_space<vmem>>, %arg5: memref<128x64xf32, #tpu.memory_space<vmem>>, %arg6: memref<1x64xf32, #tpu.memory_space<vmem>>, %arg7: memref<1x64xf32, #tpu.memory_space<vmem>>) attributes {dimension_semantics = [#tpu.dimension_semantics<arbitrary>], iteration_bounds = array<i64: 1>, scalar_prefetch = 0 : i64, scratch_operands = 0 : i64, tpu.core_type = #tpu.core_type<tc>, window_params = [{transform_indices = @transform_0, window_bounds = array<i64: 128, 49>}, {pipeline_mode = #tpu.pipeline_mode<synchronous>, transform_indices = @transform_1, window_bounds = array<i64: 49, 64>}, {pipeline_mode = #tpu.pipeline_mode<synchronous>, transform_indices = @transform_2, window_bounds = array<i64: 1, 64>}, {pipeline_mode = #tpu.pipeline_mode<synchronous>, transform_indices = @transform_3, window_bounds = array<i64: 1, 64>}, {transform_indices = @transform_4, window_bounds = array<i64: 128, 64>}, {pipeline_mode = #tpu.pipeline_mode<synchronous>, transform_indices = @transform_5, window_bounds = array<i64: 1, 64>}, {pipeline_mode = #tpu.pipeline_mode<synchronous>, transform_indices = @transform_6, window_bounds = array<i64: 1, 64>}]} {
    %c0_i32 = arith.constant 0 : i32
    %0 = arith.cmpi eq, %arg0, %c0_i32 : i32
    %1 = arith.extui %0 : i1 to i32
    %c0_i32_0 = arith.constant 0 : i32
    %2 = arith.cmpi ne, %1, %c0_i32_0 : i32
    scf.if %2 {
      %cst_20 = arith.constant 0.000000e+00 : f32
      %25 = vector.broadcast %cst_20 : f32 to vector<1x64xf32>
      %c0_21 = arith.constant 0 : index
      %c0_22 = arith.constant 0 : index
      %26 = vector.load %arg6[%c0_21, %c0_22] : memref<1x64xf32, #tpu.memory_space<vmem>>, vector<1x64xf32>
      tpu.vector_store %arg6[%c0_21, %c0_22], %25 {strides = array<i32>} : memref<1x64xf32, #tpu.memory_space<vmem>>, vector<1x64xf32>,
      %cst_23 = arith.constant 0.000000e+00 : f32
      %27 = vector.broadcast %cst_23 : f32 to vector<1x64xf32>
      %c0_24 = arith.constant 0 : index
      %c0_25 = arith.constant 0 : index
      %28 = vector.load %arg7[%c0_24, %c0_25] : memref<1x64xf32, #tpu.memory_space<vmem>>, vector<1x64xf32>
      tpu.vector_store %arg7[%c0_24, %c0_25], %27 {strides = array<i32>} : memref<1x64xf32, #tpu.memory_space<vmem>>, vector<1x64xf32>,
    } else {
    }
    %c0 = arith.constant 0 : index
    %c0_1 = arith.constant 0 : index
    %3 = vector.load %arg1[%c0, %c0_1] : memref<128x49xf32, #tpu.memory_space<vmem>>, vector<128x49xf32>
    %4 = arith.truncf %3 : vector<128x49xf32> to vector<128x49xbf16>
    %c0_2 = arith.constant 0 : index
    %c0_3 = arith.constant 0 : index
    %5 = vector.load %arg2[%c0_2, %c0_3] : memref<49x64xbf16, #tpu.memory_space<vmem>>, vector<49x64xbf16>
    %cst = arith.constant dense<0.000000e+00> : vector<128x64xf32>
    %6 = tpu.matmul %4, %5, %cst {dimension_numbers = #tpu.dot_dimension_numbers<[1], [0], [0], [1], [0, 0, 1, 1], [], []>} : vector<128x49xbf16>, vector<49x64xbf16>, vector<128x64xf32> -> vector<128x64xf32>
    %c0_4 = arith.constant 0 : index
    %c0_5 = arith.constant 0 : index
    %7 = vector.load %arg6[%c0_4, %c0_5] : memref<1x64xf32, #tpu.memory_space<vmem>>, vector<1x64xf32>
    %cst_6 = arith.constant dense<0.000000e+00> : vector<64xf32>
    %8 = vector.multi_reduction <add>, %6, %cst_6 [0] : vector<128x64xf32> to vector<64xf32>
    %9 = vector.shape_cast %8 : vector<64xf32> to vector<1x64xf32>
    %10 = arith.addf %7, %9 : vector<1x64xf32>
    %c0_7 = arith.constant 0 : index
    %c0_8 = arith.constant 0 : index
    %11 = vector.load %arg6[%c0_7, %c0_8] : memref<1x64xf32, #tpu.memory_space<vmem>>, vector<1x64xf32>
    tpu.vector_store %arg6[%c0_7, %c0_8], %10 {strides = array<i32>} : memref<1x64xf32, #tpu.memory_space<vmem>>, vector<1x64xf32>,
    %c0_9 = arith.constant 0 : index
    %c0_10 = arith.constant 0 : index
    %12 = vector.load %arg7[%c0_9, %c0_10] : memref<1x64xf32, #tpu.memory_space<vmem>>, vector<1x64xf32>
    %13 = arith.mulf %6, %6 : vector<128x64xf32>
    %cst_11 = arith.constant dense<0.000000e+00> : vector<64xf32>
    %14 = vector.multi_reduction <add>, %13, %cst_11 [0] : vector<128x64xf32> to vector<64xf32>
    %15 = vector.shape_cast %14 : vector<64xf32> to vector<1x64xf32>
    %16 = arith.addf %12, %15 : vector<1x64xf32>
    %c0_12 = arith.constant 0 : index
    %c0_13 = arith.constant 0 : index
    %17 = vector.load %arg7[%c0_12, %c0_13] : memref<1x64xf32, #tpu.memory_space<vmem>>, vector<1x64xf32>
    tpu.vector_store %arg7[%c0_12, %c0_13], %16 {strides = array<i32>} : memref<1x64xf32, #tpu.memory_space<vmem>>, vector<1x64xf32>,
    %c0_14 = arith.constant 0 : index
    %c0_15 = arith.constant 0 : index
    %18 = vector.load %arg3[%c0_14, %c0_15] : memref<1x64xf32, #tpu.memory_space<vmem>>, vector<1x64xf32>
    %19 = vector.broadcast %18 : vector<1x64xf32> to vector<128x64xf32>
    %20 = arith.mulf %6, %19 : vector<128x64xf32>
    %c0_16 = arith.constant 0 : index
    %c0_17 = arith.constant 0 : index
    %21 = vector.load %arg4[%c0_16, %c0_17] : memref<1x64xf32, #tpu.memory_space<vmem>>, vector<1x64xf32>
    %22 = vector.broadcast %21 : vector<1x64xf32> to vector<128x64xf32>
    %23 = arith.addf %20, %22 : vector<128x64xf32>
    %c0_18 = arith.constant 0 : index
    %c0_19 = arith.constant 0 : index
    %24 = vector.load %arg5[%c0_18, %c0_19] : memref<128x64xf32, #tpu.memory_space<vmem>>, vector<128x64xf32>
    tpu.vector_store %arg5[%c0_18, %c0_19], %23 {strides = array<i32>} : memref<128x64xf32, #tpu.memory_space<vmem>>, vector<128x64xf32>,
    return
  }
  func.func @transform_0(%arg0: i32) -> (i32, i32) {
    %c0_i32 = arith.constant 0 : i32
    %c0_i32_0 = arith.constant 0 : i32
    return %arg0, %c0_i32 : i32, i32
  }
  func.func @transform_1(%arg0: i32) -> (i32, i32) {
    %c0_i32 = arith.constant 0 : i32
    %c0_i32_0 = arith.constant 0 : i32
    %c0_i32_1 = arith.constant 0 : i32
    return %c0_i32, %c0_i32_0 : i32, i32
  }
  func.func @transform_2(%arg0: i32) -> (i32, i32) {
    %c0_i32 = arith.constant 0 : i32
    %c0_i32_0 = arith.constant 0 : i32
    %c0_i32_1 = arith.constant 0 : i32
    return %c0_i32, %c0_i32_0 : i32, i32
  }
  func.func @transform_3(%arg0: i32) -> (i32, i32) {
    %c0_i32 = arith.constant 0 : i32
    %c0_i32_0 = arith.constant 0 : i32
    %c0_i32_1 = arith.constant 0 : i32
    return %c0_i32, %c0_i32_0 : i32, i32
  }
  func.func @transform_4(%arg0: i32) -> (i32, i32) {
    %c0_i32 = arith.constant 0 : i32
    %c0_i32_0 = arith.constant 0 : i32
    return %arg0, %c0_i32 : i32, i32
  }
  func.func @transform_5(%arg0: i32) -> (i32, i32) {
    %c0_i32 = arith.constant 0 : i32
    %c0_i32_0 = arith.constant 0 : i32
    %c0_i32_1 = arith.constant 0 : i32
    return %c0_i32, %c0_i32_0 : i32, i32
  }
  func.func @transform_6(%arg0: i32) -> (i32, i32) {
    %c0_i32 = arith.constant 0 : i32
    %c0_i32_0 = arith.constant 0 : i32
    %c0_i32_1 = arith.constant 0 : i32
    return %c0_i32, %c0_i32_0 : i32, i32
  }
}

</mosaic_0001>

<llo_original>
// kernel: tpu_custom_call.1
$region0: #{tpu_custom_call.1}
  #allocation0 [shape = 'u32[]', space=smem, size = 0x4, offset = 0x4, fixed_abs, tag = 'smem constant byte address 0x4 - core index']
  #allocation1 [shape = 'u32[144,128]{1,0:T(1,128)}', space=vmem, size = 0x12000, scoped, tag = 'internal scratch']
  %s0 = inlined_call_operand.vmem [shape: f32[128,49], index: 0, kind: input, shape index: {}]
  %s1 = inlined_call_operand.vmem [shape: bf16[49,64], index: 1, kind: input, shape index: {}]
  %s2 = inlined_call_operand.vmem [shape: f32[1,64], index: 2, kind: input, shape index: {}]
  %s3 = inlined_call_operand.vmem [shape: f32[1,64], index: 3, kind: input, shape index: {}]
  %s4 = inlined_call_operand.vmem [shape: f32[128,64], index: 4, kind: output, shape index: {0}]
  %s5 = inlined_call_operand.hbm [shape: f32[1,64], index: 5, kind: output, shape index: {1}]
  %s6 = inlined_call_operand.hbm [shape: f32[1,64], index: 6, kind: output, shape index: {2}]
  %7 = xla_tuple %s4, %s5, %s6
  %s8 = sld [smem:[#allocation0]]
  $region46: #{tpu_custom_call.1} parent=0
    _
  %s10 = ssub.s32 1, %s8
  %s11 = scalar_select 0, %s10, %s8
  $region1: #{tpu_custom_call.1} parent=0
    #allocation2 [shape = 'u8[512]{0}', space=vmem, size = 0x400, scoped, tag = 'output window, operand 1, single buffered']
    #allocation3 [shape = 's32[1]{0}', space=sflag, size = 0x4, scoped, tag = 'scoped memory for tpu_custom_call.1']
    #allocation4 [shape = 'u8[512]{0}', space=vmem, size = 0x400, scoped, tag = 'output window, operand 2, single buffered']
    #allocation5 [shape = 's32[1]{0}', space=sflag, size = 0x4, scoped, tag = 'scoped memory for tpu_custom_call.1']
    %12 = vsyncpa [#allocation3], 0
    %13 = vsyncpa [#allocation5], 0
    // Predicated region
    $region2: #{tpu_custom_call.1} parent=1 // pred_check
      _
    $region3: #{tpu_custom_call.1} parent=1 // pred_check_branch
      %15 = sbr.rel (0) target = $region5
    $region4: #{tpu_custom_call.1} parent=1 // pred_region
      _
    $region5: #{tpu_custom_call.1} parent=1 // pred_fallthru
      _
    // Predicated region
    $region6: #{tpu_custom_call.1} parent=1 // pred_check
      _
    $region7: #{tpu_custom_call.1} parent=1 // pred_check_branch
      %17 = sbr.rel (0) target = $region9
    $region8: #{tpu_custom_call.1} parent=1 // pred_region
      _
    $region9: #{tpu_custom_call.1} parent=1 // pred_fallthru
      _
    // Predicated region
    $region10: #{tpu_custom_call.1} parent=1 // pred_check
      _
    $region11: #{tpu_custom_call.1} parent=1 // pred_check_branch
      %19 = sbr.rel (0) target = $region13
    $region12: #{tpu_custom_call.1} parent=1 // pred_region
      _
    $region13: #{tpu_custom_call.1} parent=1 // pred_fallthru
      _
    // Predicated region
    $region14: #{tpu_custom_call.1} parent=1 // pred_check
      _
    $region15: #{tpu_custom_call.1} parent=1 // pred_check_branch
      %21 = sbr.rel (0) target = $region17
    $region16: #{tpu_custom_call.1} parent=1 // pred_region
      _
    $region17: #{tpu_custom_call.1} parent=1 // pred_fallthru
      _
    %p23 = scmp.eq.s32.totalorder 0, 0
    // Predicated region
    $region18: #{tpu_custom_call.1} parent=1 // pred_check
      %p24 = pneg %p23
    $region19: #{tpu_custom_call.1} parent=1 // pred_check_branch
      %26 = sbr.rel (%p24) target = $region21
    $region20: #{tpu_custom_call.1} parent=1 // pred_region
      %vm27 = vcmask 516096
      %28 = vst.msk [vmem:[#allocation2] sm:$0x1] %vm27, 0.0
      %29 = vst.msk [vmem:[#allocation4] sm:$0x1] %vm27, 0.0
    $region21: #{tpu_custom_call.1} parent=1 // pred_fallthru
      _
    %v30 = vld [vmem:[%s0] sm:$0xff]
    %v31 = vld [vmem:[%s0 + $0x8] sm:$0xff]
    %v32 = vld [vmem:[%s0 + $0x10] sm:$0xff]
    %v33 = vld [vmem:[%s0 + $0x18] sm:$0xff]
    %v34 = vld [vmem:[%s0 + $0x20] sm:$0xff]
    %v35 = vld [vmem:[%s0 + $0x28] sm:$0xff]
    %v36 = vld [vmem:[%s0 + $0x30] sm:$0xff]
    %v37 = vld [vmem:[%s0 + $0x38] sm:$0xff]
    %v38 = vld [vmem:[%s0 + $0x40] sm:$0xff]
    %v39 = vld [vmem:[%s0 + $0x48] sm:$0xff]
    %v40 = vld [vmem:[%s0 + $0x50] sm:$0xff]
    %v41 = vld [vmem:[%s0 + $0x58] sm:$0xff]
    %v42 = vld [vmem:[%s0 + $0x60] sm:$0xff]
    %v43 = vld [vmem:[%s0 + $0x68] sm:$0xff]
    %v44 = vld [vmem:[%s0 + $0x70] sm:$0xff]
    %v45 = vld [vmem:[%s0 + $0x78] sm:$0xff]
    %v46 = vpack.c.bf16 %v31, %v30
    %v47 = vpack.c.bf16 %v33, %v32
    %v48 = vpack.c.bf16 %v35, %v34
    %v49 = vpack.c.bf16 %v37, %v36
    %v50 = vpack.c.bf16 %v39, %v38
    %v51 = vpack.c.bf16 %v41, %v40
    %v52 = vpack.c.bf16 %v43, %v42
    %v53 = vpack.c.bf16 %v45, %v44
    %v54 = vld [vmem:[%s1] sm:$0xf]
    %v55 = vld [vmem:[%s1 + $0x4] sm:$0xf]
    %v56 = vld [vmem:[%s1 + $0x8] sm:$0xf]
    %v57 = vld [vmem:[%s1 + $0xc] sm:$0xf]
    %v58 = vld [vmem:[%s1 + $0x10] sm:$0xf]
    %v59 = vld [vmem:[%s1 + $0x14] sm:$0xf]
    %v60 = vld [vmem:[%s1 + $0x18] sm:$0x1]
    %v68 = vunpack.c.l.b16 %v54
    %v69 = vunpack.c.l.b16 %v55
    %v70 = vunpack.c.l.b16 %v56
    %v71 = vunpack.c.l.b16 %v57
    %v72 = vunpack.c.l.b16 %v58
    %v73 = vunpack.c.l.b16 %v59
    %v74 = vunpack.c.l.b16 %v60
    %v75 = vpack.c.b16 %v69, %v68
    %v76 = vpack.c.b16 %v71, %v70
    %v77 = vpack.c.b16 %v73, %v72
    %v78 = vpack.c.b16 %v74, %v74
    %vm82 = vcmask 400384
    %v84 = vsel %vm82, %v46, 0
    %v87 = vsel %vm82, %v47, 0
    %v90 = vsel %vm82, %v48, 0
    %v93 = vsel %vm82, %v49, 0
    %v96 = vsel %vm82, %v50, 0
    %v99 = vsel %vm82, %v51, 0
    %v102 = vsel %vm82, %v52, 0
    %v105 = vsel %vm82, %v53, 0
    %vm107 = vcmask 1040384
    %v108 = vsel 0, 4294967295, 65535
    %v109 = vsel %vm107, %v108, 0
    %v111 = vand.u32 %v78, %v109
    %113 = vmatprep.subr.bf16.mxu0 0
    %114 = vmatpush1.bf16.msra.mxu0 %v75
    %115 = vmatprep.subr.bf16.mxu0 0
    %116 = vmatpush1.bf16.msra.mxu0 %v76
    %117 = vmatprep.subr.bf16.mxu0 0
    %118 = vmatpush1.bf16.msra.mxu0 %v77
    %119 = vmatprep.subr.bf16.mxu0 0
    %120 = vmatpush1.bf16.msra.mxu0 %v111
    %121 = vmatprep.subr.bf16.mxu0 0
    %122 = vmatpush1.bf16.msra.mxu0 0
    %123 = vmatprep.subr.bf16.mxu0 0
    %124 = vmatpush1.bf16.msra.mxu0 0
    %125 = vmatprep.subr.bf16.mxu0 0
    %126 = vmatpush1.bf16.msra.mxu0 0
    %127 = vmatprep.subr.bf16.mxu0 0
    %128 = vmatpush1.bf16.msra.mxu0 0
    %129 = vmatprep.subr.bf16.mxu0 0
    %130 = vmatpush1.bf16.msra.mxu0 0
    %131 = vmatprep.subr.bf16.mxu0 0
    %132 = vmatpush1.bf16.msra.mxu0 0
    %133 = vmatprep.subr.bf16.mxu0 0
    %134 = vmatpush1.bf16.msra.mxu0 0
    %135 = vmatprep.subr.bf16.mxu0 0
    %136 = vmatpush1.bf16.msra.mxu0 0
    %137 = vmatprep.subr.bf16.mxu0 0
    %138 = vmatpush1.bf16.msra.mxu0 0
    %139 = vmatprep.subr.bf16.mxu0 0
    %140 = vmatpush1.bf16.msra.mxu0 0
    %141 = vmatprep.subr.bf16.mxu0 0
    %142 = vmatpush1.bf16.msra.mxu0 0
    %143 = vmatprep.subr.bf16.mxu0 0
    %144 = vmatpush1.bf16.msra.mxu0 0
    %145 = vmatprep.mubr.bf16.mxu0 0
    %146 = vmatmul.mubr.bf16.gmra.mrb[0].mxu0 %v84
    %v147 = vpop.f32.mrb[0].mxu0
    %v148 = vadd.f32 0.0, %v147
    %v149 = vpop.f32.mrb[0].mxu0
    %v150 = vpop.f32.mrb[0].mxu0
    %v151 = vadd.f32 0.0, %v150
    %v152 = vpop.f32.mrb[0].mxu0
    %153 = vmatprep.mubr.bf16.mxu0 0
    %154 = vmatmul.mubr.bf16.gmra.mrb[0].mxu0 %v87
    %v155 = vpop.f32.mrb[0].mxu0
    %v156 = vadd.f32 0.0, %v155
    %v157 = vpop.f32.mrb[0].mxu0
    %v158 = vpop.f32.mrb[0].mxu0
    %v159 = vadd.f32 0.0, %v158
    %v160 = vpop.f32.mrb[0].mxu0
    %161 = vmatprep.mubr.bf16.mxu0 0
    %162 = vmatmul.mubr.bf16.gmra.mrb[0].mxu0 %v90
    %v163 = vpop.f32.mrb[0].mxu0
    %v164 = vadd.f32 0.0, %v163
    %v165 = vpop.f32.mrb[0].mxu0
    %v166 = vpop.f32.mrb[0].mxu0
    %v167 = vadd.f32 0.0, %v166
    %v168 = vpop.f32.mrb[0].mxu0
    %169 = vmatprep.mubr.bf16.mxu0 0
    %170 = vmatmul.mubr.bf16.gmra.mrb[0].mxu0 %v93
    %v171 = vpop.f32.mrb[0].mxu0
    %v172 = vadd.f32 0.0, %v171
    %v173 = vpop.f32.mrb[0].mxu0
    %v174 = vpop.f32.mrb[0].mxu0
    %v175 = vadd.f32 0.0, %v174
    %v176 = vpop.f32.mrb[0].mxu0
    %177 = vmatprep.mubr.bf16.mxu0 0
    %178 = vmatmul.mubr.bf16.gmra.mrb[0].mxu0 %v96
    %v179 = vpop.f32.mrb[0].mxu0
    %v180 = vadd.f32 0.0, %v179
    %v181 = vpop.f32.mrb[0].mxu0
    %v182 = vpop.f32.mrb[0].mxu0
    %v183 = vadd.f32 0.0, %v182
    %v184 = vpop.f32.mrb[0].mxu0
    %185 = vmatprep.mubr.bf16.mxu0 0
    %186 = vmatmul.mubr.bf16.gmra.mrb[0].mxu0 %v99
    %v187 = vpop.f32.mrb[0].mxu0
    %v188 = vadd.f32 0.0, %v187
    %v189 = vpop.f32.mrb[0].mxu0
    %v190 = vpop.f32.mrb[0].mxu0
    %v191 = vadd.f32 0.0, %v190
    %v192 = vpop.f32.mrb[0].mxu0
    %193 = vmatprep.mubr.bf16.mxu0 0
    %194 = vmatmul.mubr.bf16.gmra.mrb[0].mxu0 %v102
    %v195 = vpop.f32.mrb[0].mxu0
    %v196 = vadd.f32 0.0, %v195
    %v197 = vpop.f32.mrb[0].mxu0
    %v198 = vpop.f32.mrb[0].mxu0
    %v199 = vadd.f32 0.0, %v198
    %v200 = vpop.f32.mrb[0].mxu0
    %201 = vmatprep.mubr.bf16.mxu0 0
    %202 = vmatmul.mubr.bf16.gmra.mrb[0].mxu0 %v105
    %v203 = vpop.f32.mrb[0].mxu0
    %v204 = vadd.f32 0.0, %v203
    %v205 = vpop.f32.mrb[0].mxu0
    %v206 = vpop.f32.mrb[0].mxu0
    %v207 = vadd.f32 0.0, %v206
    %v208 = vpop.f32.mrb[0].mxu0
    %209 = vdwg.mxu0
    %v210 = vld [vmem:[#allocation2] sm:$0x1]
    %vm211 = vcmask 523264
    %v212 = vsel %vm211, %v148, 0.0
    %v213 = vsel %vm211, %v151, 0.0
    %v214 = vadd.f32 %v212, %v213
    %v215 = vsel %vm211, %v156, 0.0
    %v216 = vadd.f32 %v214, %v215
    %v217 = vsel %vm211, %v159, 0.0
    %v218 = vadd.f32 %v216, %v217
    %v219 = vsel %vm211, %v164, 0.0
    %v220 = vadd.f32 %v218, %v219
    %v221 = vsel %vm211, %v167, 0.0
    %v222 = vadd.f32 %v220, %v221
    %v223 = vsel %vm211, %v172, 0.0
    %v224 = vadd.f32 %v222, %v223
    %v225 = vsel %vm211, %v175, 0.0
    %v226 = vadd.f32 %v224, %v225
    %v227 = vsel %vm211, %v180, 0.0
    %v228 = vadd.f32 %v226, %v227
    %v229 = vsel %vm211, %v183, 0.0
    %v230 = vadd.f32 %v228, %v229
    %v231 = vsel %vm211, %v188, 0.0
    %v232 = vadd.f32 %v230, %v231
    %v233 = vsel %vm211, %v191, 0.0
    %v234 = vadd.f32 %v232, %v233
    %v235 = vsel %vm211, %v196, 0.0
    %v236 = vadd.f32 %v234, %v235
    %v237 = vsel %vm211, %v199, 0.0
    %v238 = vadd.f32 %v236, %v237
    %v239 = vsel %vm211, %v204, 0.0
    %v240 = vadd.f32 %v238, %v239
    %v241 = vsel %vm211, %v207, 0.0
    %v242 = vadd.f32 %v240, %v241
    %v243 = vrot.slane %v242, 4
    %v244 = vadd.f32 %v242, %v243
    %v245 = vrot.slane %v244, 2
    %v246 = vadd.f32 %v244, %v245
    %v247 = vrot.slane %v246, 1
    %v248 = vadd.f32 %v246, %v247
    %v249 = vadd.f32 %v210, %v248
    %vm250 = vcmask 516096
    %251 = vst.msk [vmem:[#allocation2] sm:$0x1] %vm250, %v249
    %v252 = vld [vmem:[#allocation4] sm:$0x1]
    %v253 = vmul.f32 %v148, %v148
    %v254 = vmul.f32 %v151, %v151
    %v255 = vmul.f32 %v156, %v156
    %v256 = vmul.f32 %v159, %v159
    %v257 = vmul.f32 %v164, %v164
    %v258 = vmul.f32 %v167, %v167
    %v259 = vmul.f32 %v172, %v172
    %v260 = vmul.f32 %v175, %v175
    %v261 = vmul.f32 %v180, %v180
    %v262 = vmul.f32 %v183, %v183
    %v263 = vmul.f32 %v188, %v188
    %v264 = vmul.f32 %v191, %v191
    %v265 = vmul.f32 %v196, %v196
    %v266 = vmul.f32 %v199, %v199
    %v267 = vmul.f32 %v204, %v204
    %v268 = vmul.f32 %v207, %v207
    %v269 = vsel %vm211, %v253, 0.0
    %v270 = vsel %vm211, %v254, 0.0
    %v271 = vadd.f32 %v269, %v270
    %v272 = vsel %vm211, %v255, 0.0
    %v273 = vadd.f32 %v271, %v272
    %v274 = vsel %vm211, %v256, 0.0
    %v275 = vadd.f32 %v273, %v274
    %v276 = vsel %vm211, %v257, 0.0
    %v277 = vadd.f32 %v275, %v276
    %v278 = vsel %vm211, %v258, 0.0
    %v279 = vadd.f32 %v277, %v278
    %v280 = vsel %vm211, %v259, 0.0
    %v281 = vadd.f32 %v279, %v280
    %v282 = vsel %vm211, %v260, 0.0
    %v283 = vadd.f32 %v281, %v282
    %v284 = vsel %vm211, %v261, 0.0
    %v285 = vadd.f32 %v283, %v284
    %v286 = vsel %vm211, %v262, 0.0
    %v287 = vadd.f32 %v285, %v286
    %v288 = vsel %vm211, %v263, 0.0
    %v289 = vadd.f32 %v287, %v288
    %v290 = vsel %vm211, %v264, 0.0
    %v291 = vadd.f32 %v289, %v290
    %v292 = vsel %vm211, %v265, 0.0
    %v293 = vadd.f32 %v291, %v292
    %v294 = vsel %vm211, %v266, 0.0
    %v295 = vadd.f32 %v293, %v294
    %v296 = vsel %vm211, %v267, 0.0
    %v297 = vadd.f32 %v295, %v296
    %v298 = vsel %vm211, %v268, 0.0
    %v299 = vadd.f32 %v297, %v298
    %v300 = vrot.slane %v299, 4
    %v301 = vadd.f32 %v299, %v300
    %v302 = vrot.slane %v301, 2
    %v303 = vadd.f32 %v301, %v302
    %v304 = vrot.slane %v303, 1
    %v305 = vadd.f32 %v303, %v304
    %v306 = vadd.f32 %v252, %v305
    %307 = vst.msk [vmem:[#allocation4] sm:$0x1] %vm250, %v306
    %v308 = vld [vmem:[%s2] sm:$0x1]
    %v310 = vlaneseq
    %v311 = vshrl.u32 %v310, 7
    %v312 = vsub.s32 0, %v311
    %v313 = vrot.slane %v308, %v312
    %v315 = vmul.f32 %v148, %v313
    %v316 = vmul.f32 %v151, %v313
    %v317 = vmul.f32 %v156, %v313
    %v318 = vmul.f32 %v159, %v313
    %v319 = vmul.f32 %v164, %v313
    %v320 = vmul.f32 %v167, %v313
    %v321 = vmul.f32 %v172, %v313
    %v322 = vmul.f32 %v175, %v313
    %v323 = vmul.f32 %v180, %v313
    %v324 = vmul.f32 %v183, %v313
    %v325 = vmul.f32 %v188, %v313
    %v326 = vmul.f32 %v191, %v313
    %v327 = vmul.f32 %v196, %v313
    %v328 = vmul.f32 %v199, %v313
    %v329 = vmul.f32 %v204, %v313
    %v330 = vmul.f32 %v207, %v313
    %v331 = vld [vmem:[%s3] sm:$0x1]
    %v333 = vlaneseq
    %v334 = vshrl.u32 %v333, 7
    %v335 = vsub.s32 0, %v334
    %v336 = vrot.slane %v331, %v335
    %v338 = vadd.f32 %v315, %v336
    %v339 = vadd.f32 %v316, %v336
    %v340 = vadd.f32 %v317, %v336
    %v341 = vadd.f32 %v318, %v336
    %v342 = vadd.f32 %v319, %v336
    %v343 = vadd.f32 %v320, %v336
    %v344 = vadd.f32 %v321, %v336
    %v345 = vadd.f32 %v322, %v336
    %v346 = vadd.f32 %v323, %v336
    %v347 = vadd.f32 %v324, %v336
    %v348 = vadd.f32 %v325, %v336
    %v349 = vadd.f32 %v326, %v336
    %v350 = vadd.f32 %v327, %v336
    %v351 = vadd.f32 %v328, %v336
    %v352 = vadd.f32 %v329, %v336
    %v353 = vadd.f32 %v330, %v336
    %354 = vst.msk [vmem:[%s4] sm:$0xff] %vm211, %v338
    %355 = vst.msk [vmem:[%s4 + $0x8] sm:$0xff] %vm211, %v339
    %356 = vst.msk [vmem:[%s4 + $0x10] sm:$0xff] %vm211, %v340
    %357 = vst.msk [vmem:[%s4 + $0x18] sm:$0xff] %vm211, %v341
    %358 = vst.msk [vmem:[%s4 + $0x20] sm:$0xff] %vm211, %v342
    %359 = vst.msk [vmem:[%s4 + $0x28] sm:$0xff] %vm211, %v343
    %360 = vst.msk [vmem:[%s4 + $0x30] sm:$0xff] %vm211, %v344
    %361 = vst.msk [vmem:[%s4 + $0x38] sm:$0xff] %vm211, %v345
    %362 = vst.msk [vmem:[%s4 + $0x40] sm:$0xff] %vm211, %v346
    %363 = vst.msk [vmem:[%s4 + $0x48] sm:$0xff] %vm211, %v347
    %364 = vst.msk [vmem:[%s4 + $0x50] sm:$0xff] %vm211, %v348
    %365 = vst.msk [vmem:[%s4 + $0x58] sm:$0xff] %vm211, %v349
    %366 = vst.msk [vmem:[%s4 + $0x60] sm:$0xff] %vm211, %v350
    %367 = vst.msk [vmem:[%s4 + $0x68] sm:$0xff] %vm211, %v351
    %368 = vst.msk [vmem:[%s4 + $0x70] sm:$0xff] %vm211, %v352
    %369 = vst.msk [vmem:[%s4 + $0x78] sm:$0xff] %vm211, %v353
    // Predicated region
    $region22: #{tpu_custom_call.1} parent=1 // pred_check
      _
    $region23: #{tpu_custom_call.1} parent=1 // pred_check_branch
      %371 = sbr.rel (0) target = $region25
    $region24: #{tpu_custom_call.1} parent=1 // pred_region
      _
    $region25: #{tpu_custom_call.1} parent=1 // pred_fallthru
      _
    // Predicated region
    $region26: #{tpu_custom_call.1} parent=1 // pred_check
      _
    $region27: #{tpu_custom_call.1} parent=1 // pred_check_branch
      %373 = sbr.rel (0) target = $region29
    $region28: #{tpu_custom_call.1} parent=1 // pred_region
      %s375 = ssub.s32 16, 16
      %376 = vsyncadd [#allocation3], %s375
      %s378 = sshll.u32 [#allocation2], 4
      %s379 = int_to_ptr.vmem [resolvable:$true] %s378
      %381 = dma.vmem_to_hbm [thread:$0]  %s379, 16, %s5, [#allocation3]
    $region29: #{tpu_custom_call.1} parent=1 // pred_fallthru
      _
    // Predicated region
    $region30: #{tpu_custom_call.1} parent=1 // pred_check
      _
    $region31: #{tpu_custom_call.1} parent=1 // pred_check_branch
      %383 = sbr.rel (0) target = $region33
    $region32: #{tpu_custom_call.1} parent=1 // pred_region
      %s385 = ssub.s32 16, 16
      %386 = vsyncadd [#allocation5], %s385
      %s388 = sshll.u32 [#allocation4], 4
      %s389 = int_to_ptr.vmem [resolvable:$true] %s388
      %391 = dma.vmem_to_hbm [thread:$0]  %s389, 16, %s6, [#allocation5]
    $region33: #{tpu_custom_call.1} parent=1 // pred_fallthru
      _
    // Predicated region
    $region34: #{tpu_custom_call.1} parent=1 // pred_check
      _
    $region35: #{tpu_custom_call.1} parent=1 // pred_check_branch
      %393 = sbr.rel (0) target = $region37
    $region36: #{tpu_custom_call.1} parent=1 // pred_region
      _
    $region37: #{tpu_custom_call.1} parent=1 // pred_fallthru
      _
    // Predicated region
    $region38: #{tpu_custom_call.1} parent=1 // pred_check
      _
    $region39: #{tpu_custom_call.1} parent=1 // pred_check_branch
      %395 = sbr.rel (0) target = $region41
    $region40: #{tpu_custom_call.1} parent=1 // pred_region
      %396 = dma.done [#allocation3], 16
    $region41: #{tpu_custom_call.1} parent=1 // pred_fallthru
      _
    // Predicated region
    $region42: #{tpu_custom_call.1} parent=1 // pred_check
      _
    $region43: #{tpu_custom_call.1} parent=1 // pred_check_branch
      %398 = sbr.rel (0) target = $region45
    $region44: #{tpu_custom_call.1} parent=1 // pred_region
      %399 = dma.done [#allocation5], 16
    $region45: #{tpu_custom_call.1} parent=1 // pred_fallthru
      _
    %400 = vsyncpa [#allocation3], 1
    %401 = vsyncpa [#allocation5], 1

</llo_original>
